<compile_context>
chip_gen: v7x
topology: tpu7x:2x2x1
jax: 0.10.0
libtpu: 0.0.40
codegen_flags: <defaults>
</compile_context>

<pallas_src>
import jax
import jax.numpy as jnp
from jax.experimental import pallas as pl
from jax.experimental.pallas import tpu as pltpu

D_IN, D_OUT = 8, 2
BLOCK_B = 512          # lane-dense batch block (multiple of 128)


def toy_agent_kernel(x_ref, w_ref, o_ref):
    # x_ref: (D_IN, BLOCK_B) VMEM; w_ref: (D_OUT, D_IN) SMEM; o_ref: (D_OUT, BLOCK_B) VMEM
    x = x_ref[...]                                   # (8, Bblk): one tile load
    rows = [x[k:k + 1, :] for k in range(D_IN)]      # static sublane slices
    # Unrolled VPU scalar-broadcast multiply-adds; weights read as SMEM scalars.
    l0 = w_ref[0, 0] * rows[0]
    l1 = w_ref[1, 0] * rows[0]
    for k in range(1, D_IN):
        l0 = l0 + w_ref[0, k] * rows[k]
        l1 = l1 + w_ref[1, k] * rows[k]
    # 2-class log-softmax via numerically stable softplus (single exp + log1p).
    d = l1 - l0                                                   # (1, Bblk)
    sp = jnp.maximum(d, 0.0) + jnp.log1p(jnp.exp(-jnp.abs(d)))    # softplus(d)
    o_ref[0:1, :] = -sp                                           # l0 - lse
    o_ref[1:2, :] = d - sp                                        # l1 - lse


@jax.jit
def toy_agent_forward(x, w):
    """x: (B, 8) f32; w: (2, 8) f32 (PyTorch Linear weight layout). Returns (B, 2)."""
    B = x.shape[0]
    x_t = x.T                                        # (D_IN, B): batch -> lane axis
    n_blk = pl.cdiv(B, BLOCK_B)
    Bp = n_blk * BLOCK_B
    if Bp != B:
        x_t = jnp.pad(x_t, ((0, 0), (0, Bp - B)))    # pad batch to full lane blocks
    out_t = pl.pallas_call(
        toy_agent_kernel,
        out_shape=jax.ShapeDtypeStruct((D_OUT, Bp), jnp.float32),
        grid_spec=pltpu.PrefetchScalarGridSpec(
            num_scalar_prefetch=0,
            grid=(n_blk,),
            in_specs=[
                pl.BlockSpec((D_IN, BLOCK_B), lambda i: (0, i)),          # x tiles
                pl.BlockSpec(memory_space=pltpu.MemorySpace.SMEM),        # 16 weights
            ],
            out_specs=pl.BlockSpec((D_OUT, BLOCK_B), lambda i: (0, i)),
        ),
        compiler_params=pltpu.CompilerParams(
            dimension_semantics=("parallel",)),      # shard batch blocks across TCs
    )(x_t, w)
    return out_t[:, :B].T                            # back to (B, 2)


if __name__ == "__main__":
    key = jax.random.PRNGKey(0)
    kx, kw, kx2 = jax.random.split(key, 3)

    # Deterministic example input and weight (shapes from ToyAgent.__init__).
    B = 2
    x = jax.random.normal(kx, (B, D_IN), dtype=jnp.float32)
    # Mimic PyTorch Linear default uniform(-1/sqrt(in), 1/sqrt(in)) init.
    bound = 1.0 / (D_IN ** 0.5)
    w = jax.random.uniform(kw, (D_OUT, D_IN), dtype=jnp.float32,
                           minval=-bound, maxval=bound)

    out = toy_agent_forward(x, w)
    jax.block_until_ready(out)

    ref = jax.nn.log_softmax(x @ w.T, axis=1)
    assert out.shape == (B, D_OUT)
    assert jnp.allclose(out, ref, atol=1e-5, rtol=1e-5)

    # Also exercise the batched / padded grid path (2 lane-dense blocks).
    B2 = 1000
    x2 = jax.random.normal(kx2, (B2, D_IN), dtype=jnp.float32)
    out2 = toy_agent_forward(x2, w)
    jax.block_until_ready(out2)
    ref2 = jax.nn.log_softmax(x2 @ w.T, axis=1)
    assert out2.shape == (B2, D_OUT)
    assert jnp.allclose(out2, ref2, atol=1e-5, rtol=1e-5)

    print("KERNEL_OK")
</pallas_src>

<mosaic_0001>
module attributes {stable_mosaic.version = 11 : i64} {
  func.func @toy_agent_kernel(%arg0: i32, %arg1: memref<8x512xf32, #tpu.memory_space<vmem>>, %arg2: memref<2x8xf32, #tpu.memory_space<smem>>, %arg3: memref<2x512xf32, #tpu.memory_space<vmem>>) attributes {dimension_semantics = [#tpu.dimension_semantics<parallel>], iteration_bounds = array<i64: 1>, scalar_prefetch = 0 : i64, scratch_operands = 0 : i64, tpu.core_type = #tpu.core_type<tc>, window_params = [{transform_indices = @transform_0, window_bounds = array<i64: 8, 512>}, {transform_indices = @transform_1, window_bounds = array<i64: 2, 8>}, {transform_indices = @transform_2, window_bounds = array<i64: 2, 512>}]} {
    %c0 = arith.constant 0 : index
    %c0_0 = arith.constant 0 : index
    %0 = vector.load %arg1[%c0, %c0_0] : memref<8x512xf32, #tpu.memory_space<vmem>>, vector<8x512xf32>
    %1 = vector.extract_strided_slice %0 {offsets = [0, 0], sizes = [1, 512], strides = [1, 1]} : vector<8x512xf32> to vector<1x512xf32>
    %2 = vector.extract_strided_slice %0 {offsets = [1, 0], sizes = [1, 512], strides = [1, 1]} : vector<8x512xf32> to vector<1x512xf32>
    %3 = vector.extract_strided_slice %0 {offsets = [2, 0], sizes = [1, 512], strides = [1, 1]} : vector<8x512xf32> to vector<1x512xf32>
    %4 = vector.extract_strided_slice %0 {offsets = [3, 0], sizes = [1, 512], strides = [1, 1]} : vector<8x512xf32> to vector<1x512xf32>
    %5 = vector.extract_strided_slice %0 {offsets = [4, 0], sizes = [1, 512], strides = [1, 1]} : vector<8x512xf32> to vector<1x512xf32>
    %6 = vector.extract_strided_slice %0 {offsets = [5, 0], sizes = [1, 512], strides = [1, 1]} : vector<8x512xf32> to vector<1x512xf32>
    %7 = vector.extract_strided_slice %0 {offsets = [6, 0], sizes = [1, 512], strides = [1, 1]} : vector<8x512xf32> to vector<1x512xf32>
    %8 = vector.extract_strided_slice %0 {offsets = [7, 0], sizes = [1, 512], strides = [1, 1]} : vector<8x512xf32> to vector<1x512xf32>
    %c0_1 = arith.constant 0 : index
    %c0_2 = arith.constant 0 : index
    %9 = memref.load %arg2[%c0_1, %c0_2] : memref<2x8xf32, #tpu.memory_space<smem>>
    %10 = vector.broadcast %9 : f32 to vector<1x512xf32>
    %11 = arith.mulf %10, %1 : vector<1x512xf32>
    %c1 = arith.constant 1 : index
    %c0_3 = arith.constant 0 : index
    %12 = memref.load %arg2[%c1, %c0_3] : memref<2x8xf32, #tpu.memory_space<smem>>
    %13 = vector.broadcast %12 : f32 to vector<1x512xf32>
    %14 = arith.mulf %13, %1 : vector<1x512xf32>
    %c0_4 = arith.constant 0 : index
    %c1_5 = arith.constant 1 : index
    %15 = memref.load %arg2[%c0_4, %c1_5] : memref<2x8xf32, #tpu.memory_space<smem>>
    %16 = vector.broadcast %15 : f32 to vector<1x512xf32>
    %17 = arith.mulf %16, %2 : vector<1x512xf32>
    %18 = arith.addf %11, %17 : vector<1x512xf32>
    %c1_6 = arith.constant 1 : index
    %c1_7 = arith.constant 1 : index
    %19 = memref.load %arg2[%c1_6, %c1_7] : memref<2x8xf32, #tpu.memory_space<smem>>
    %20 = vector.broadcast %19 : f32 to vector<1x512xf32>
    %21 = arith.mulf %20, %2 : vector<1x512xf32>
    %22 = arith.addf %14, %21 : vector<1x512xf32>
    %c0_8 = arith.constant 0 : index
    %c2 = arith.constant 2 : index
    %23 = memref.load %arg2[%c0_8, %c2] : memref<2x8xf32, #tpu.memory_space<smem>>
    %24 = vector.broadcast %23 : f32 to vector<1x512xf32>
    %25 = arith.mulf %24, %3 : vector<1x512xf32>
    %26 = arith.addf %18, %25 : vector<1x512xf32>
    %c1_9 = arith.constant 1 : index
    %c2_10 = arith.constant 2 : index
    %27 = memref.load %arg2[%c1_9, %c2_10] : memref<2x8xf32, #tpu.memory_space<smem>>
    %28 = vector.broadcast %27 : f32 to vector<1x512xf32>
    %29 = arith.mulf %28, %3 : vector<1x512xf32>
    %30 = arith.addf %22, %29 : vector<1x512xf32>
    %c0_11 = arith.constant 0 : index
    %c3 = arith.constant 3 : index
    %31 = memref.load %arg2[%c0_11, %c3] : memref<2x8xf32, #tpu.memory_space<smem>>
    %32 = vector.broadcast %31 : f32 to vector<1x512xf32>
    %33 = arith.mulf %32, %4 : vector<1x512xf32>
    %34 = arith.addf %26, %33 : vector<1x512xf32>
    %c1_12 = arith.constant 1 : index
    %c3_13 = arith.constant 3 : index
    %35 = memref.load %arg2[%c1_12, %c3_13] : memref<2x8xf32, #tpu.memory_space<smem>>
    %36 = vector.broadcast %35 : f32 to vector<1x512xf32>
    %37 = arith.mulf %36, %4 : vector<1x512xf32>
    %38 = arith.addf %30, %37 : vector<1x512xf32>
    %c0_14 = arith.constant 0 : index
    %c4 = arith.constant 4 : index
    %39 = memref.load %arg2[%c0_14, %c4] : memref<2x8xf32, #tpu.memory_space<smem>>
    %40 = vector.broadcast %39 : f32 to vector<1x512xf32>
    %41 = arith.mulf %40, %5 : vector<1x512xf32>
    %42 = arith.addf %34, %41 : vector<1x512xf32>
    %c1_15 = arith.constant 1 : index
    %c4_16 = arith.constant 4 : index
    %43 = memref.load %arg2[%c1_15, %c4_16] : memref<2x8xf32, #tpu.memory_space<smem>>
    %44 = vector.broadcast %43 : f32 to vector<1x512xf32>
    %45 = arith.mulf %44, %5 : vector<1x512xf32>
    %46 = arith.addf %38, %45 : vector<1x512xf32>
    %c0_17 = arith.constant 0 : index
    %c5 = arith.constant 5 : index
    %47 = memref.load %arg2[%c0_17, %c5] : memref<2x8xf32, #tpu.memory_space<smem>>
    %48 = vector.broadcast %47 : f32 to vector<1x512xf32>
    %49 = arith.mulf %48, %6 : vector<1x512xf32>
    %50 = arith.addf %42, %49 : vector<1x512xf32>
    %c1_18 = arith.constant 1 : index
    %c5_19 = arith.constant 5 : index
    %51 = memref.load %arg2[%c1_18, %c5_19] : memref<2x8xf32, #tpu.memory_space<smem>>
    %52 = vector.broadcast %51 : f32 to vector<1x512xf32>
    %53 = arith.mulf %52, %6 : vector<1x512xf32>
    %54 = arith.addf %46, %53 : vector<1x512xf32>
    %c0_20 = arith.constant 0 : index
    %c6 = arith.constant 6 : index
    %55 = memref.load %arg2[%c0_20, %c6] : memref<2x8xf32, #tpu.memory_space<smem>>
    %56 = vector.broadcast %55 : f32 to vector<1x512xf32>
    %57 = arith.mulf %56, %7 : vector<1x512xf32>
    %58 = arith.addf %50, %57 : vector<1x512xf32>
    %c1_21 = arith.constant 1 : index
    %c6_22 = arith.constant 6 : index
    %59 = memref.load %arg2[%c1_21, %c6_22] : memref<2x8xf32, #tpu.memory_space<smem>>
    %60 = vector.broadcast %59 : f32 to vector<1x512xf32>
    %61 = arith.mulf %60, %7 : vector<1x512xf32>
    %62 = arith.addf %54, %61 : vector<1x512xf32>
    %c0_23 = arith.constant 0 : index
    %c7 = arith.constant 7 : index
    %63 = memref.load %arg2[%c0_23, %c7] : memref<2x8xf32, #tpu.memory_space<smem>>
    %64 = vector.broadcast %63 : f32 to vector<1x512xf32>
    %65 = arith.mulf %64, %8 : vector<1x512xf32>
    %66 = arith.addf %58, %65 : vector<1x512xf32>
    %c1_24 = arith.constant 1 : index
    %c7_25 = arith.constant 7 : index
    %67 = memref.load %arg2[%c1_24, %c7_25] : memref<2x8xf32, #tpu.memory_space<smem>>
    %68 = vector.broadcast %67 : f32 to vector<1x512xf32>
    %69 = arith.mulf %68, %8 : vector<1x512xf32>
    %70 = arith.addf %62, %69 : vector<1x512xf32>
    %71 = arith.subf %70, %66 : vector<1x512xf32>
    %cst = arith.constant 0.000000e+00 : f32
    %72 = vector.broadcast %cst : f32 to vector<1x512xf32>
    %73 = arith.maximumf %71, %72 : vector<1x512xf32>
    %74 = math.absf %71 : vector<1x512xf32>
    %cst_26 = arith.constant 0.000000e+00 : f32
    %75 = vector.broadcast %cst_26 : f32 to vector<1x512xf32>
    %76 = arith.subf %75, %74 : vector<1x512xf32>
    %77 = math.exp %76 : vector<1x512xf32>
    %78 = math.log1p %77 : vector<1x512xf32>
    %79 = arith.addf %73, %78 : vector<1x512xf32>
    %cst_27 = arith.constant 0.000000e+00 : f32
    %80 = vector.broadcast %cst_27 : f32 to vector<1x512xf32>
    %81 = arith.subf %80, %79 : vector<1x512xf32>
    %c0_28 = arith.constant 0 : index
    %c0_29 = arith.constant 0 : index
    %82 = vector.load %arg3[%c0_28, %c0_29] : memref<2x512xf32, #tpu.memory_space<vmem>>, vector<1x512xf32>
    tpu.vector_store %arg3[%c0_28, %c0_29], %81 {strides = array<i32>} : memref<2x512xf32, #tpu.memory_space<vmem>>, vector<1x512xf32>,
    %83 = arith.subf %71, %79 : vector<1x512xf32>
    %c1_30 = arith.constant 1 : index
    %c0_31 = arith.constant 0 : index
    %84 = vector.load %arg3[%c1_30, %c0_31] : memref<2x512xf32, #tpu.memory_space<vmem>>, vector<1x512xf32>
    tpu.vector_store %arg3[%c1_30, %c0_31], %83 {strides = array<i32>} : memref<2x512xf32, #tpu.memory_space<vmem>>, vector<1x512xf32>,
    return
  }
  func.func @transform_0(%arg0: i32) -> (i32, i32) {
    %c0_i32 = arith.constant 0 : i32
    %c0_i32_0 = arith.constant 0 : i32
    return %c0_i32, %arg0 : i32, i32
  }
  func.func @transform_1(%arg0: i32) -> (i32, i32) {
    %c0_i32 = arith.constant 0 : i32
    %c0_i32_0 = arith.constant 0 : i32
    %c0_i32_1 = arith.constant 0 : i32
    return %c0_i32, %c0_i32_0 : i32, i32
  }
  func.func @transform_2(%arg0: i32) -> (i32, i32) {
    %c0_i32 = arith.constant 0 : i32
    %c0_i32_0 = arith.constant 0 : i32
    return %c0_i32, %arg0 : i32, i32
  }
}

</mosaic_0001>

<llo_original>
// kernel: toy_agent_forward.1
$region0: #{toy_agent_forward.1}
  #allocation0 [shape = 'u32[]', space=smem, size = 0x4, offset = 0x4, fixed_abs, tag = 'smem constant byte address 0x4 - core index']
  #allocation1 [shape = 'u32[144,128]{1,0:T(1,128)}', space=vmem, size = 0x12000, scoped, tag = 'internal scratch']
  %s0 = inlined_call_operand.vmem [shape: f32[8,512], index: 0, kind: input, shape index: {}]
  %s1 = inlined_call_operand.vmem [shape: f32[2,8], index: 1, kind: input, shape index: {}]
  %s2 = inlined_call_operand.vmem [shape: f32[2,512], index: 2, kind: output, shape index: {}]
  %s3 = sld [smem:[#allocation0]]
  $region22: #{toy_agent_forward.1} parent=0
    _
  %s5 = ssub.s32 1, %s3
  %s6 = scalar_select 0, %s5, %s3
  $region1: #{toy_agent_forward.1} parent=0
    #allocation2 [shape = 'u8[1024]{0}', space=smem, size = 0x400, scoped, tag = 'input window, operand 1, single buffered']
    #allocation3 [shape = 's32[1]{0}', space=sflag, size = 0x4, scoped, tag = 'scoped memory for toy_agent_forward.1']
    %7 = vsyncpa [#allocation3], 0
    // Predicated region
    $region2: #{toy_agent_forward.1} parent=1 // pred_check
      _
    $region3: #{toy_agent_forward.1} parent=1 // pred_check_branch
      %9 = sbr.rel (0) target = $region5
    $region4: #{toy_agent_forward.1} parent=1 // pred_region
      _
    $region5: #{toy_agent_forward.1} parent=1 // pred_fallthru
      _
    // Predicated region
    $region6: #{toy_agent_forward.1} parent=1 // pred_check
      _
    $region7: #{toy_agent_forward.1} parent=1 // pred_check_branch
      %11 = sbr.rel (0) target = $region9
    $region8: #{toy_agent_forward.1} parent=1 // pred_region
      %s13 = ssub.s32 32, 32
      %14 = vsyncadd [#allocation3], %s13
      %s16 = sshll.u32 %s1, 4
      %s17 = int_to_ptr.vmem [resolvable:$true] %s16
      %19 = dma.vmem_to_smem %s17, 32, [#allocation2], [#allocation3]
    $region9: #{toy_agent_forward.1} parent=1 // pred_fallthru
      _
    // Predicated region
    $region10: #{toy_agent_forward.1} parent=1 // pred_check
      _
    $region11: #{toy_agent_forward.1} parent=1 // pred_check_branch
      %21 = sbr.rel (0) target = $region13
    $region12: #{toy_agent_forward.1} parent=1 // pred_region
      %22 = dma.done [#allocation3], 32
    $region13: #{toy_agent_forward.1} parent=1 // pred_fallthru
      _
    %23 = sfence
    %v24 = vld [vmem:[%s0] sm:$0xff]
    %v25 = vld [vmem:[%s0 + $0x8] sm:$0xff]
    %v26 = vld [vmem:[%s0 + $0x10] sm:$0xff]
    %v27 = vld [vmem:[%s0 + $0x18] sm:$0xff]
    %s28 = sld [smem:[#allocation2]]
    %v29 = vstv %s28
    %v30 = vmul.f32 %v29, %v24
    %v31 = vmul.f32 %v29, %v25
    %v32 = vmul.f32 %v29, %v26
    %v33 = vmul.f32 %v29, %v27
    %s34 = sld [smem:[#allocation2 + $0x80]]
    %v35 = vstv %s34
    %v36 = vmul.f32 %v35, %v24
    %v37 = vmul.f32 %v35, %v25
    %v38 = vmul.f32 %v35, %v26
    %v39 = vmul.f32 %v35, %v27
    %s40 = sld [smem:[#allocation2 + $0x1]]
    %v41 = vstv %s40
    %v42 = vmul.f32 %v41, %v24
    %v43 = vmul.f32 %v41, %v25
    %v44 = vmul.f32 %v41, %v26
    %v45 = vmul.f32 %v41, %v27
    %v50 = vrot.slane %v42, 1
    %v51 = vrot.slane %v43, 1
    %v52 = vrot.slane %v44, 1
    %v53 = vrot.slane %v45, 1
    %v58 = vadd.f32 %v30, %v50
    %v59 = vadd.f32 %v31, %v51
    %v60 = vadd.f32 %v32, %v52
    %v61 = vadd.f32 %v33, %v53
    %s62 = sld [smem:[#allocation2 + $0x81]]
    %v63 = vstv %s62
    %v64 = vmul.f32 %v63, %v24
    %v65 = vmul.f32 %v63, %v25
    %v66 = vmul.f32 %v63, %v26
    %v67 = vmul.f32 %v63, %v27
    %v72 = vrot.slane %v64, 1
    %v73 = vrot.slane %v65, 1
    %v74 = vrot.slane %v66, 1
    %v75 = vrot.slane %v67, 1
    %v80 = vadd.f32 %v36, %v72
    %v81 = vadd.f32 %v37, %v73
    %v82 = vadd.f32 %v38, %v74
    %v83 = vadd.f32 %v39, %v75
    %s84 = sld [smem:[#allocation2 + $0x2]]
    %v85 = vstv %s84
    %v86 = vmul.f32 %v85, %v24
    %v87 = vmul.f32 %v85, %v25
    %v88 = vmul.f32 %v85, %v26
    %v89 = vmul.f32 %v85, %v27
    %v94 = vrot.slane %v86, 2
    %v95 = vrot.slane %v87, 2
    %v96 = vrot.slane %v88, 2
    %v97 = vrot.slane %v89, 2
    %v102 = vadd.f32 %v58, %v94
    %v103 = vadd.f32 %v59, %v95
    %v104 = vadd.f32 %v60, %v96
    %v105 = vadd.f32 %v61, %v97
    %s106 = sld [smem:[#allocation2 + $0x82]]
    %v107 = vstv %s106
    %v108 = vmul.f32 %v107, %v24
    %v109 = vmul.f32 %v107, %v25
    %v110 = vmul.f32 %v107, %v26
    %v111 = vmul.f32 %v107, %v27
    %v116 = vrot.slane %v108, 2
    %v117 = vrot.slane %v109, 2
    %v118 = vrot.slane %v110, 2
    %v119 = vrot.slane %v111, 2
    %v124 = vadd.f32 %v80, %v116
    %v125 = vadd.f32 %v81, %v117
    %v126 = vadd.f32 %v82, %v118
    %v127 = vadd.f32 %v83, %v119
    %s128 = sld [smem:[#allocation2 + $0x3]]
    %v129 = vstv %s128
    %v130 = vmul.f32 %v129, %v24
    %v131 = vmul.f32 %v129, %v25
    %v132 = vmul.f32 %v129, %v26
    %v133 = vmul.f32 %v129, %v27
    %v138 = vrot.slane %v130, 3
    %v139 = vrot.slane %v131, 3
    %v140 = vrot.slane %v132, 3
    %v141 = vrot.slane %v133, 3
    %v146 = vadd.f32 %v102, %v138
    %v147 = vadd.f32 %v103, %v139
    %v148 = vadd.f32 %v104, %v140
    %v149 = vadd.f32 %v105, %v141
    %s150 = sld [smem:[#allocation2 + $0x83]]
    %v151 = vstv %s150
    %v152 = vmul.f32 %v151, %v24
    %v153 = vmul.f32 %v151, %v25
    %v154 = vmul.f32 %v151, %v26
    %v155 = vmul.f32 %v151, %v27
    %v160 = vrot.slane %v152, 3
    %v161 = vrot.slane %v153, 3
    %v162 = vrot.slane %v154, 3
    %v163 = vrot.slane %v155, 3
    %v168 = vadd.f32 %v124, %v160
    %v169 = vadd.f32 %v125, %v161
    %v170 = vadd.f32 %v126, %v162
    %v171 = vadd.f32 %v127, %v163
    %s172 = sld [smem:[#allocation2 + $0x4]]
    %v173 = vstv %s172
    %v174 = vmul.f32 %v173, %v24
    %v175 = vmul.f32 %v173, %v25
    %v176 = vmul.f32 %v173, %v26
    %v177 = vmul.f32 %v173, %v27
    %v182 = vrot.slane %v174, 4
    %v183 = vrot.slane %v175, 4
    %v184 = vrot.slane %v176, 4
    %v185 = vrot.slane %v177, 4
    %v190 = vadd.f32 %v146, %v182
    %v191 = vadd.f32 %v147, %v183
    %v192 = vadd.f32 %v148, %v184
    %v193 = vadd.f32 %v149, %v185
    %s194 = sld [smem:[#allocation2 + $0x84]]
    %v195 = vstv %s194
    %v196 = vmul.f32 %v195, %v24
    %v197 = vmul.f32 %v195, %v25
    %v198 = vmul.f32 %v195, %v26
    %v199 = vmul.f32 %v195, %v27
    %v204 = vrot.slane %v196, 4
    %v205 = vrot.slane %v197, 4
    %v206 = vrot.slane %v198, 4
    %v207 = vrot.slane %v199, 4
    %v212 = vadd.f32 %v168, %v204
    %v213 = vadd.f32 %v169, %v205
    %v214 = vadd.f32 %v170, %v206
    %v215 = vadd.f32 %v171, %v207
    %s216 = sld [smem:[#allocation2 + $0x5]]
    %v217 = vstv %s216
    %v218 = vmul.f32 %v217, %v24
    %v219 = vmul.f32 %v217, %v25
    %v220 = vmul.f32 %v217, %v26
    %v221 = vmul.f32 %v217, %v27
    %v226 = vrot.slane %v218, 5
    %v227 = vrot.slane %v219, 5
    %v228 = vrot.slane %v220, 5
    %v229 = vrot.slane %v221, 5
    %v234 = vadd.f32 %v190, %v226
    %v235 = vadd.f32 %v191, %v227
    %v236 = vadd.f32 %v192, %v228
    %v237 = vadd.f32 %v193, %v229
    %s238 = sld [smem:[#allocation2 + $0x85]]
    %v239 = vstv %s238
    %v240 = vmul.f32 %v239, %v24
    %v241 = vmul.f32 %v239, %v25
    %v242 = vmul.f32 %v239, %v26
    %v243 = vmul.f32 %v239, %v27
    %v248 = vrot.slane %v240, 5
    %v249 = vrot.slane %v241, 5
    %v250 = vrot.slane %v242, 5
    %v251 = vrot.slane %v243, 5
    %v256 = vadd.f32 %v212, %v248
    %v257 = vadd.f32 %v213, %v249
    %v258 = vadd.f32 %v214, %v250
    %v259 = vadd.f32 %v215, %v251
    %s260 = sld [smem:[#allocation2 + $0x6]]
    %v261 = vstv %s260
    %v262 = vmul.f32 %v261, %v24
    %v263 = vmul.f32 %v261, %v25
    %v264 = vmul.f32 %v261, %v26
    %v265 = vmul.f32 %v261, %v27
    %v270 = vrot.slane %v262, 6
    %v271 = vrot.slane %v263, 6
    %v272 = vrot.slane %v264, 6
    %v273 = vrot.slane %v265, 6
    %v278 = vadd.f32 %v234, %v270
    %v279 = vadd.f32 %v235, %v271
    %v280 = vadd.f32 %v236, %v272
    %v281 = vadd.f32 %v237, %v273
    %s282 = sld [smem:[#allocation2 + $0x86]]
    %v283 = vstv %s282
    %v284 = vmul.f32 %v283, %v24
    %v285 = vmul.f32 %v283, %v25
    %v286 = vmul.f32 %v283, %v26
    %v287 = vmul.f32 %v283, %v27
    %v292 = vrot.slane %v284, 6
    %v293 = vrot.slane %v285, 6
    %v294 = vrot.slane %v286, 6
    %v295 = vrot.slane %v287, 6
    %v300 = vadd.f32 %v256, %v292
    %v301 = vadd.f32 %v257, %v293
    %v302 = vadd.f32 %v258, %v294
    %v303 = vadd.f32 %v259, %v295
    %s304 = sld [smem:[#allocation2 + $0x7]]
    %v305 = vstv %s304
    %v306 = vmul.f32 %v305, %v24
    %v307 = vmul.f32 %v305, %v25
    %v308 = vmul.f32 %v305, %v26
    %v309 = vmul.f32 %v305, %v27
    %v314 = vrot.slane %v306, 7
    %v315 = vrot.slane %v307, 7
    %v316 = vrot.slane %v308, 7
    %v317 = vrot.slane %v309, 7
    %v322 = vadd.f32 %v278, %v314
    %v323 = vadd.f32 %v279, %v315
    %v324 = vadd.f32 %v280, %v316
    %v325 = vadd.f32 %v281, %v317
    %s326 = sld [smem:[#allocation2 + $0x87]]
    %v327 = vstv %s326
    %v328 = vmul.f32 %v327, %v24
    %v329 = vmul.f32 %v327, %v25
    %v330 = vmul.f32 %v327, %v26
    %v331 = vmul.f32 %v327, %v27
    %v336 = vrot.slane %v328, 7
    %v337 = vrot.slane %v329, 7
    %v338 = vrot.slane %v330, 7
    %v339 = vrot.slane %v331, 7
    %v344 = vadd.f32 %v300, %v336
    %v345 = vadd.f32 %v301, %v337
    %v346 = vadd.f32 %v302, %v338
    %v347 = vadd.f32 %v303, %v339
    %v348 = vsub.f32 %v344, %v322
    %v349 = vsub.f32 %v345, %v323
    %v350 = vsub.f32 %v346, %v324
    %v351 = vsub.f32 %v347, %v325
    %v352 = vmax.f32 %v348, 0.0
    %v353 = vmax.f32 %v349, 0.0
    %v354 = vmax.f32 %v350, 0.0
    %v355 = vmax.f32 %v351, 0.0
    %v356 = vand.u32 2147483647, %v348
    %v357 = vand.u32 2147483647, %v349
    %v358 = vand.u32 2147483647, %v350
    %v359 = vand.u32 2147483647, %v351
    %v360 = vsub.f32 0.0, %v356
    %v361 = vsub.f32 0.0, %v357
    %v362 = vsub.f32 0.0, %v358
    %v363 = vsub.f32 0.0, %v359
    %v364 = vmul.f32 %v360, 1.442695
    %v365 = vpow.pop %v364
    %v366 = vmul.f32 %v361, 1.442695
    %v367 = vpow.pop %v366
    %v368 = vmul.f32 %v362, 1.442695
    %v369 = vpow.pop %v368
    %v370 = vmul.f32 %v363, 1.442695
    %v371 = vpow.pop %v370
    %v372 = vadd.f32 %v365, 1.0
    %v373 = vlog2.pop %v372
    %v374 = vmul.f32 %v373, 0.6931472
    %v375 = vmul.f32 -0.5, %v365
    %v376 = vadd.f32 %v375, 1.0
    %v377 = vmul.f32 %v376, %v365
    %v378 = vand.u32 2147483647, %v365
    %vm379 = vcmp.lt.f32.partialorder %v378, 0.0004427343
    %v380 = vsel %vm379, %v377, %v374
    %v381 = vadd.f32 %v367, 1.0
    %v382 = vlog2.pop %v381
    %v383 = vmul.f32 %v382, 0.6931472
    %v384 = vmul.f32 -0.5, %v367
    %v385 = vadd.f32 %v384, 1.0
    %v386 = vmul.f32 %v385, %v367
    %v387 = vand.u32 2147483647, %v367
    %vm388 = vcmp.lt.f32.partialorder %v387, 0.0004427343
    %v389 = vsel %vm388, %v386, %v383
    %v390 = vadd.f32 %v369, 1.0
    %v391 = vlog2.pop %v390
    %v392 = vmul.f32 %v391, 0.6931472
    %v393 = vmul.f32 -0.5, %v369
    %v394 = vadd.f32 %v393, 1.0
    %v395 = vmul.f32 %v394, %v369
    %v396 = vand.u32 2147483647, %v369
    %vm397 = vcmp.lt.f32.partialorder %v396, 0.0004427343
    %v398 = vsel %vm397, %v395, %v392
    %v399 = vadd.f32 %v371, 1.0
    %v400 = vlog2.pop %v399
    %v401 = vmul.f32 %v400, 0.6931472
    %v402 = vmul.f32 -0.5, %v371
    %v403 = vadd.f32 %v402, 1.0
    %v404 = vmul.f32 %v403, %v371
    %v405 = vand.u32 2147483647, %v371
    %vm406 = vcmp.lt.f32.partialorder %v405, 0.0004427343
    %v407 = vsel %vm406, %v404, %v401
    %v408 = vadd.f32 %v352, %v380
    %v409 = vadd.f32 %v353, %v389
    %v410 = vadd.f32 %v354, %v398
    %v411 = vadd.f32 %v355, %v407
    %v412 = vsub.f32 0.0, %v408
    %v413 = vsub.f32 0.0, %v409
    %v414 = vsub.f32 0.0, %v410
    %v415 = vsub.f32 0.0, %v411
    %v420 = vcombine.low %v412, %v413
    %v421 = vcombine.low %v414, %v415
    %v423 = vunpack.c.l.s4 1966171168
    %v424 = vunpack.c.0.s8 %v423
    %v425 = vlaneseq
    %v426 = vshrl.u32 %v425, 7
    %v427 = vsub.s32 %v424, %v426
    %v428 = vrot.slane %v420, %v427
    %v430 = vunpack.c.l.s4 1966171168
    %v431 = vunpack.c.0.s8 %v430
    %v432 = vlaneseq
    %v433 = vshrl.u32 %v432, 7
    %v434 = vsub.s32 %v431, %v433
    %v435 = vrot.slane %v421, %v434
    %v436 = vcombine.low %v428, %v435
    %v438 = vunpack.c.l.s4 1966171168
    %v439 = vunpack.c.0.s8 %v438
    %v440 = vlaneseq
    %v441 = vshrl.u32 %v440, 7
    %v442 = vsub.s32 %v439, %v441
    %v443 = vrot.slane %v436, %v442
    %v445 = vlaneseq
    %vm446 = vcmp.ge.s32.totalorder %v445, 0
    %vm447 = vcmp.lt.s32.totalorder %v445, 512
    %vm448 = vmand %vm446, %vm447
    %449 = vst.msk [vmem:[%s2] ss:$2 sm:$0xf] %vm448, %v443
    %v450 = vsub.f32 %v348, %v408
    %v451 = vsub.f32 %v349, %v409
    %v452 = vsub.f32 %v350, %v410
    %v453 = vsub.f32 %v351, %v411
    %v458 = vcombine.low %v450, %v451
    %v459 = vcombine.low %v452, %v453
    %v461 = vunpack.c.l.s4 1966171168
    %v462 = vunpack.c.0.s8 %v461
    %v463 = vlaneseq
    %v464 = vshrl.u32 %v463, 7
    %v465 = vsub.s32 %v462, %v464
    %v466 = vrot.slane %v458, %v465
    %v468 = vunpack.c.l.s4 1966171168
    %v469 = vunpack.c.0.s8 %v468
    %v470 = vlaneseq
    %v471 = vshrl.u32 %v470, 7
    %v472 = vsub.s32 %v469, %v471
    %v473 = vrot.slane %v459, %v472
    %v474 = vcombine.low %v466, %v473
    %v476 = vunpack.c.l.s4 1966171168
    %v477 = vunpack.c.0.s8 %v476
    %v478 = vlaneseq
    %v479 = vshrl.u32 %v478, 7
    %v480 = vsub.s32 %v477, %v479
    %v481 = vrot.slane %v474, %v480
    %s483 = scalar_lea.vmem %s2, 1
    %484 = vst.msk [vmem:[%s483] ss:$2 sm:$0xf] %vm448, %v481
    // Predicated region
    $region14: #{toy_agent_forward.1} parent=1 // pred_check
      _
    $region15: #{toy_agent_forward.1} parent=1 // pred_check_branch
      %486 = sbr.rel (0) target = $region17
    $region16: #{toy_agent_forward.1} parent=1 // pred_region
      _
    $region17: #{toy_agent_forward.1} parent=1 // pred_fallthru
      _
    // Predicated region
    $region18: #{toy_agent_forward.1} parent=1 // pred_check
      _
    $region19: #{toy_agent_forward.1} parent=1 // pred_check_branch
      %488 = sbr.rel (0) target = $region21
    $region20: #{toy_agent_forward.1} parent=1 // pred_region
      _
    $region21: #{toy_agent_forward.1} parent=1 // pred_fallthru
      _
    %489 = vsyncpa [#allocation3], 1

</llo_original>
